<compile_context>
chip_gen: v7x
topology: tpu7x:2x2x1
jax: 0.10.0
libtpu: 0.0.40
codegen_flags: <defaults>
</compile_context>

<pallas_src>
import functools
import math

import jax
import jax.numpy as jnp
from jax import lax
from jax.experimental import pallas as pl
from jax.experimental.pallas import tpu as pltpu


def _cdiv(a, b):
    return -(-a // b)


def _label_smoothing_kernel(pred_ref, tgt_logit_ref, tgt_ref, out_ref,
                            m_acc, l_acc, s_acc, loss_acc,
                            *, eps: float, ignore_index: int, vocab_total: int):
    """Grid = (chunk, row_tile_idx, vocab_tile_idx).

    Online log-softmax over vocab tiles; per-row smoothed NLL finalized on the
    last vocab tile; masked accumulate into the per-chunk loss; scalar collapse
    and lane-dense store only on the last (row, vocab) step of each chunk."""
    r = pl.program_id(1)
    v = pl.program_id(2)
    nr = pl.num_programs(1)
    nv = pl.num_programs(2)

    @pl.when(jnp.logical_and(r == 0, v == 0))
    def _():                                   # start of a chunk
        loss_acc[...] = jnp.zeros_like(loss_acc)

    @pl.when(v == 0)
    def _():                                   # start of a row tile's vocab sweep
        m_acc[...] = jnp.full_like(m_acc, -jnp.inf)
        l_acc[...] = jnp.zeros_like(l_acc)
        s_acc[...] = jnp.zeros_like(s_acc)

    # Upcast in-kernel so bf16 logits can be fed directly (halves HBM traffic).
    logits = pred_ref[...].astype(jnp.float32)                     # (RT, VT)

    m_prev = m_acc[...]
    m_new = jnp.maximum(m_prev, jnp.max(logits, axis=-1, keepdims=True))
    # exp(-inf - finite) == 0 handles the first vocab block cleanly.
    l_acc[...] = (jnp.exp(m_prev - m_new) * l_acc[...]
                  + jnp.sum(jnp.exp(logits - m_new), axis=-1, keepdims=True))
    s_acc[...] = s_acc[...] + jnp.sum(logits, axis=-1, keepdims=True)
    m_acc[...] = m_new

    @pl.when(v == nv - 1)
    def _():
        lse = m_acc[...] + jnp.log(l_acc[...])                      # (RT, 1)
        sum_lp = s_acc[...] - float(vocab_total) * lse              # sum_j lp_j
        lp_tgt = tgt_logit_ref[...] - lse                           # lp[target]
        smooth = eps / (vocab_total - 1)                            # static
        loss_row = -(smooth * sum_lp + (1.0 - eps - smooth) * lp_tgt)
        # Mask immediately adjacent to the accumulate: rows with ignore_index
        # targets (including padded / partial-block tail rows whose logits are
        # garbage) contribute nothing, and NaN/Inf never crosses rows.
        valid = tgt_ref[...] != ignore_index
        loss_acc[...] += jnp.where(valid, loss_row, 0.0)

    @pl.when(jnp.logical_and(r == nr - 1, v == nv - 1))
    def _():
        total = jnp.sum(loss_acc[...])
        rid = lax.broadcasted_iota(jnp.int32, (8, 128), 0)
        cid = lax.broadcasted_iota(jnp.int32, (8, 128), 1)
        out_ref[...] = jnp.where((rid == 0) & (cid == 0), total, 0.0)


def _vmem_capacity_bytes():
    try:
        return int(pltpu.get_tpu_info().vmem_capacity_bytes)
    except Exception:
        return 64 * 1024 * 1024       # conservative (v7x-sized) fallback


def _default_num_chunks():
    # Outer "parallel" chunk axis only pays off on 2-TensorCore parts (v7x).
    try:
        kind = jax.devices()[0].device_kind.lower()
    except Exception:
        return 1
    return 4 if "v7" in kind else 1


def _largest_divisor_at_most(n, k):
    k = max(1, min(int(k), int(n)))
    for c in range(k, 0, -1):
        if n % c == 0:
            return c
    return 1


def _pick_tiles(n, vocab, itemsize, vmem_cap):
    """Choose (row_tile, vocab_tile).

    VMEM budget accounts for the double-buffered input tile PLUS ~3 f32
    full-tile intermediates (upcast logits, shifted, exp), with headroom for
    scratch / pipeline -- sized off the real VMEM capacity so the same code is
    safe on 64 MiB (v7x) and uses larger tiles on 128 MiB (v5e/v6e)."""
    packing = max(8, 32 // max(int(itemsize), 1))        # f32 -> 8, bf16 -> 16
    max_vt = 16384
    if vocab <= max_vt or vocab % 128 != 0:
        vt = vocab                                       # untiled vocab
    else:
        units = vocab // 128
        best = 1
        for d in range(1, int(units ** 0.5) + 1):
            if units % d == 0:
                for cand in (d, units // d):
                    if cand * 128 <= max_vt and cand > best:
                        best = cand
        vt = best * 128                                  # exactly divides vocab

    budget = int(0.5 * vmem_cap)
    per_row = vt * (2 * int(itemsize) + 3 * 4)           # 2x input + 3x f32
    rt = budget // max(per_row, 1)
    rt = max(packing, (rt // packing) * packing)
    rt = min(rt, 2048)                                   # amortization saturates
    n_ceil = ((n + packing - 1) // packing) * packing
    return int(min(rt, n_ceil)), int(vt)


def label_smoothing_loss(pred, target, *, label_smoothing: float,
                         vocab_size: int, ignore_index: int = -100,
                         row_tile: int | None = None,
                         vocab_tile: int | None = None,
                         num_chunks: int | None = None):
    """Pallas implementation of LabelSmoothingLoss.forward.

    pred:   (B, S, vocab_size) float logits (f32 or bf16)
    target: (B, S) int class indices
    returns scalar float32 mean loss over rows whose target != ignore_index.
    """
    assert pred.shape[-1] == vocab_size
    n = math.prod(pred.shape[:-1])
    pred2d = pred.reshape(n, vocab_size)                 # no copy, no padding
    tgt2d = target.reshape(n, 1).astype(jnp.int32)

    # Hoisted out of the kernel: tiny per-row gather of the target logit and
    # the valid-row count (both O(N), negligible vs. the O(N*V) logit stream).
    safe_tgt = jnp.clip(tgt2d, 0, vocab_size - 1)
    tgt_logit = jnp.take_along_axis(pred2d, safe_tgt, axis=-1).astype(jnp.float32)
    valid_count = jnp.sum((tgt2d != ignore_index).astype(jnp.float32))

    itemsize = jnp.dtype(pred2d.dtype).itemsize
    vmem_cap = _vmem_capacity_bytes()
    auto_rt, auto_vt = _pick_tiles(n, vocab_size, itemsize, vmem_cap)
    if row_tile is None:
        row_tile = auto_rt
    if vocab_tile is None:
        vocab_tile = auto_vt
    assert row_tile % 8 == 0, "row_tile must be a multiple of 8"
    assert vocab_size % vocab_tile == 0, "vocab_tile must divide vocab_size"
    assert vocab_tile == vocab_size or vocab_tile % 128 == 0

    total_tiles = _cdiv(n, row_tile)
    if num_chunks is None:
        num_chunks = _default_num_chunks()
    num_chunks = _largest_divisor_at_most(total_tiles, num_chunks)
    tiles_per_chunk = total_tiles // num_chunks
    vocab_tiles = vocab_size // vocab_tile

    # Only the tiny per-row arrays get padded (ignore_index tail).  The big
    # logits array is never copied: the final partial row block reads
    # unspecified tail values which are masked out in the kernel.
    n_tgt = total_tiles * row_tile
    if n_tgt != n:
        tgt2d = jnp.pad(tgt2d, ((0, n_tgt - n), (0, 0)),
                        constant_values=ignore_index)
        tgt_logit = jnp.pad(tgt_logit, ((0, n_tgt - n), (0, 0)))

    last_row_block = total_tiles - 1

    def pred_map(c, r, v):
        # Defensive clamp; with num_chunks dividing total_tiles it never fires.
        return (jnp.minimum(c * tiles_per_chunk + r, last_row_block), v)

    def row_map(c, r, v):
        return (c * tiles_per_chunk + r, 0)

    def out_map(c, r, v):
        return (c, 0)

    kernel = functools.partial(_label_smoothing_kernel,
                               eps=float(label_smoothing),
                               ignore_index=int(ignore_index),
                               vocab_total=int(vocab_size))

    in_tile_bytes = row_tile * vocab_tile * int(itemsize)
    f32_tile_bytes = row_tile * vocab_tile * 4
    vmem_limit = 2 * in_tile_bytes + 3 * f32_tile_bytes + (4 << 20)
    vmem_limit = int(min(max(vmem_limit, 32 << 20), int(0.9 * vmem_cap)))

    loss_parts = pl.pallas_call(
        kernel,
        out_shape=jax.ShapeDtypeStruct((num_chunks * 8, 128), jnp.float32),
        grid_spec=pltpu.PrefetchScalarGridSpec(
            num_scalar_prefetch=0,
            grid=(num_chunks, tiles_per_chunk, vocab_tiles),
            in_specs=[
                pl.BlockSpec((row_tile, vocab_tile), pred_map),
                pl.BlockSpec((row_tile, 1), row_map),     # target logit
                pl.BlockSpec((row_tile, 1), row_map),     # target index
            ],
            out_specs=pl.BlockSpec((8, 128), out_map),    # lane-dense partials
            scratch_shapes=[
                pltpu.VMEM((row_tile, 1), jnp.float32),   # running max
                pltpu.VMEM((row_tile, 1), jnp.float32),   # running sum-exp
                pltpu.VMEM((row_tile, 1), jnp.float32),   # running sum(logits)
                pltpu.VMEM((row_tile, 1), jnp.float32),   # per-chunk loss acc
            ],
        ),
        compiler_params=pltpu.CompilerParams(
            dimension_semantics=("parallel", "arbitrary", "arbitrary"),
            vmem_limit_bytes=vmem_limit),
    )(pred2d, tgt_logit, tgt2d)

    # NOTE: if every target equals ignore_index the count is 0 and this
    # returns NaN/Inf, exactly like the PyTorch / JAX references.
    return jnp.sum(loss_parts) / valid_count


def _reference(pred, target, eps, vocab_size, ignore_index):
    """Pure-JAX reference matching the PyTorch module."""
    pred = pred.reshape(-1, vocab_size).astype(jnp.float32)
    target = target.reshape(-1)
    mask = target != ignore_index
    lp = jax.nn.log_softmax(pred, axis=-1)
    smooth = eps / (vocab_size - 1)
    true_dist = jnp.full_like(pred, smooth)
    onehot = jax.nn.one_hot(jnp.clip(target, 0, vocab_size - 1), vocab_size,
                            dtype=bool)
    true_dist = jnp.where(onehot, 1.0 - eps, true_dist)
    true_dist = jnp.where(mask[:, None], true_dist, 0.0)
    loss = -(true_dist * lp).sum(axis=1)
    return jnp.sum(jnp.where(mask, loss, 0.0)) / jnp.sum(mask)


if __name__ == "__main__":
    key = jax.random.PRNGKey(0)
    eps = 0.1
    ignore_index = -100

    # Case 1: canonical (B, S, V) shape, auto tiling (single tile).
    B, S, V = 2, 8, 128
    k1, k2, k3, k4, k5, k6, k7, k8, k9 = jax.random.split(key, 9)
    pred = jax.random.normal(k1, (B, S, V), dtype=jnp.float32)
    target = jax.random.randint(k2, (B, S), 0, V, dtype=jnp.int32)
    target = jnp.where(jax.random.bernoulli(k3, 0.25, (B, S)),
                       ignore_index, target)
    out = jax.block_until_ready(
        label_smoothing_loss(pred, target, label_smoothing=eps,
                             vocab_size=V, ignore_index=ignore_index))
    ref = _reference(pred, target, eps, V, ignore_index)
    assert jnp.allclose(out, ref, rtol=1e-5, atol=1e-5), (out, ref)

    # Case 2: row count not a multiple of the tile -> partial pred block
    # (no logits padding), masked tail rows.
    B2, S2 = 3, 5
    pred2 = jax.random.normal(k4, (B2, S2, V), dtype=jnp.float32)
    target2 = jax.random.randint(k5, (B2, S2), 0, V, dtype=jnp.int32)
    target2 = jnp.where(jax.random.bernoulli(k6, 0.25, (B2, S2)),
                        ignore_index, target2)
    out2 = jax.block_until_ready(
        label_smoothing_loss(pred2, target2, label_smoothing=eps,
                             vocab_size=V, ignore_index=ignore_index,
                             row_tile=8))
    ref2 = _reference(pred2, target2, eps, V, ignore_index)
    assert jnp.allclose(out2, ref2, rtol=1e-5, atol=1e-5), (out2, ref2)

    # Case 3: exercise vocab tiling (online softmax) + multiple chunks.
    B3, S3, V3 = 2, 16, 256
    pred3 = jax.random.normal(k7, (B3, S3, V3), dtype=jnp.float32)
    target3 = jax.random.randint(k8, (B3, S3), 0, V3, dtype=jnp.int32)
    target3 = jnp.where(jax.random.bernoulli(k9, 0.25, (B3, S3)),
                        ignore_index, target3)
    out3 = jax.block_until_ready(
        label_smoothing_loss(pred3, target3, label_smoothing=eps,
                             vocab_size=V3, ignore_index=ignore_index,
                             row_tile=8, vocab_tile=128, num_chunks=2))
    ref3 = _reference(pred3, target3, eps, V3, ignore_index)
    assert jnp.allclose(out3, ref3, rtol=1e-5, atol=1e-5), (out3, ref3)

    # Case 4: bf16 logits (HBM-traffic lever on v5e/v6e), auto tiling.
    pred4 = pred3.astype(jnp.bfloat16)
    out4 = jax.block_until_ready(
        label_smoothing_loss(pred4, target3, label_smoothing=eps,
                             vocab_size=V3, ignore_index=ignore_index))
    ref4 = _reference(pred4, target3, eps, V3, ignore_index)
    assert jnp.allclose(out4, ref4, rtol=1e-4, atol=1e-4), (out4, ref4)

    print("KERNEL_OK")
</pallas_src>

<mosaic_0001>
module attributes {stable_mosaic.version = 11 : i64} {
  func.func @_label_smoothing_kernel(%arg0: i32, %arg1: i32, %arg2: i32, %arg3: memref<16x128xf32, #tpu.memory_space<vmem>>, %arg4: memref<16x1xf32, #tpu.memory_space<vmem>>, %arg5: memref<16x1xi32, #tpu.memory_space<vmem>>, %arg6: memref<8x128xf32, #tpu.memory_space<vmem>>, %arg7: memref<16x1xf32, #tpu.memory_space<vmem>>, %arg8: memref<16x1xf32, #tpu.memory_space<vmem>>, %arg9: memref<16x1xf32, #tpu.memory_space<vmem>>, %arg10: memref<16x1xf32, #tpu.memory_space<vmem>>) attributes {dimension_semantics = [#tpu.dimension_semantics<parallel>, #tpu.dimension_semantics<arbitrary>, #tpu.dimension_semantics<arbitrary>], iteration_bounds = array<i64: 1, 1, 1>, scalar_prefetch = 0 : i64, scratch_operands = 4 : i64, tpu.core_type = #tpu.core_type<tc>, window_params = [{transform_indices = @transform_0, window_bounds = array<i64: 16, 128>}, {transform_indices = @transform_1, window_bounds = array<i64: 16, 1>}, {transform_indices = @transform_2, window_bounds = array<i64: 16, 1>}, {transform_indices = @transform_3, window_bounds = array<i64: 8, 128>}]} {
    %c0_i32 = arith.constant 0 : i32
    %0 = arith.cmpi eq, %arg1, %c0_i32 : i32
    %c0_i32_0 = arith.constant 0 : i32
    %1 = arith.cmpi eq, %arg2, %c0_i32_0 : i32
    %2 = arith.andi %0, %1 : i1
    %3 = arith.extui %2 : i1 to i32
    %c0_i32_1 = arith.constant 0 : i32
    %4 = arith.cmpi ne, %3, %c0_i32_1 : i32
    scf.if %4 {
      %cst_24 = arith.constant 0.000000e+00 : f32
      %38 = vector.broadcast %cst_24 : f32 to vector<16x1xf32>
      %c0_25 = arith.constant 0 : index
      %c0_26 = arith.constant 0 : index
      %39 = vector.load %arg10[%c0_25, %c0_26] : memref<16x1xf32, #tpu.memory_space<vmem>>, vector<16x1xf32>
      tpu.vector_store %arg10[%c0_25, %c0_26], %38 {strides = array<i32>} : memref<16x1xf32, #tpu.memory_space<vmem>>, vector<16x1xf32>,
    } else {
    }
    %c0_i32_2 = arith.constant 0 : i32
    %5 = arith.cmpi eq, %arg2, %c0_i32_2 : i32
    %6 = arith.extui %5 : i1 to i32
    %c0_i32_3 = arith.constant 0 : i32
    %7 = arith.cmpi ne, %6, %c0_i32_3 : i32
    scf.if %7 {
      %cst_24 = arith.constant 0xFF800000 : f32
      %38 = vector.broadcast %cst_24 : f32 to vector<16x1xf32>
      %c0_25 = arith.constant 0 : index
      %c0_26 = arith.constant 0 : index
      %39 = vector.load %arg7[%c0_25, %c0_26] : memref<16x1xf32, #tpu.memory_space<vmem>>, vector<16x1xf32>
      tpu.vector_store %arg7[%c0_25, %c0_26], %38 {strides = array<i32>} : memref<16x1xf32, #tpu.memory_space<vmem>>, vector<16x1xf32>,
      %cst_27 = arith.constant 0.000000e+00 : f32
      %40 = vector.broadcast %cst_27 : f32 to vector<16x1xf32>
      %c0_28 = arith.constant 0 : index
      %c0_29 = arith.constant 0 : index
      %41 = vector.load %arg8[%c0_28, %c0_29] : memref<16x1xf32, #tpu.memory_space<vmem>>, vector<16x1xf32>
      tpu.vector_store %arg8[%c0_28, %c0_29], %40 {strides = array<i32>} : memref<16x1xf32, #tpu.memory_space<vmem>>, vector<16x1xf32>,
      %cst_30 = arith.constant 0.000000e+00 : f32
      %42 = vector.broadcast %cst_30 : f32 to vector<16x1xf32>
      %c0_31 = arith.constant 0 : index
      %c0_32 = arith.constant 0 : index
      %43 = vector.load %arg9[%c0_31, %c0_32] : memref<16x1xf32, #tpu.memory_space<vmem>>, vector<16x1xf32>
      tpu.vector_store %arg9[%c0_31, %c0_32], %42 {strides = array<i32>} : memref<16x1xf32, #tpu.memory_space<vmem>>, vector<16x1xf32>,
    } else {
    }
    %c0 = arith.constant 0 : index
    %c0_4 = arith.constant 0 : index
    %8 = vector.load %arg3[%c0, %c0_4] : memref<16x128xf32, #tpu.memory_space<vmem>>, vector<16x128xf32>
    %c0_5 = arith.constant 0 : index
    %c0_6 = arith.constant 0 : index
    %9 = vector.load %arg7[%c0_5, %c0_6] : memref<16x1xf32, #tpu.memory_space<vmem>>, vector<16x1xf32>
    %cst = arith.constant dense<0xFF800000> : vector<16xf32>
    %10 = vector.multi_reduction <maximumf>, %8, %cst [1] : vector<16x128xf32> to vector<16xf32>
    %11 = vector.shape_cast %10 : vector<16xf32> to vector<16x1xf32>
    %12 = arith.maximumf %9, %11 : vector<16x1xf32>
    %13 = arith.subf %9, %12 : vector<16x1xf32>
    %14 = math.exp %13 : vector<16x1xf32>
    %c0_7 = arith.constant 0 : index
    %c0_8 = arith.constant 0 : index
    %15 = vector.load %arg8[%c0_7, %c0_8] : memref<16x1xf32, #tpu.memory_space<vmem>>, vector<16x1xf32>
    %16 = arith.mulf %14, %15 : vector<16x1xf32>
    %17 = vector.broadcast %12 : vector<16x1xf32> to vector<16x128xf32>
    %18 = arith.subf %8, %17 : vector<16x128xf32>
    %19 = math.exp %18 : vector<16x128xf32>
    %cst_9 = arith.constant dense<0.000000e+00> : vector<16xf32>
    %20 = vector.multi_reduction <add>, %19, %cst_9 [1] : vector<16x128xf32> to vector<16xf32>
    %21 = vector.shape_cast %20 : vector<16xf32> to vector<16x1xf32>
    %22 = arith.addf %16, %21 : vector<16x1xf32>
    %c0_10 = arith.constant 0 : index
    %c0_11 = arith.constant 0 : index
    %23 = vector.load %arg8[%c0_10, %c0_11] : memref<16x1xf32, #tpu.memory_space<vmem>>, vector<16x1xf32>
    tpu.vector_store %arg8[%c0_10, %c0_11], %22 {strides = array<i32>} : memref<16x1xf32, #tpu.memory_space<vmem>>, vector<16x1xf32>,
    %c0_12 = arith.constant 0 : index
    %c0_13 = arith.constant 0 : index
    %24 = vector.load %arg9[%c0_12, %c0_13] : memref<16x1xf32, #tpu.memory_space<vmem>>, vector<16x1xf32>
    %cst_14 = arith.constant dense<0.000000e+00> : vector<16xf32>
    %25 = vector.multi_reduction <add>, %8, %cst_14 [1] : vector<16x128xf32> to vector<16xf32>
    %26 = vector.shape_cast %25 : vector<16xf32> to vector<16x1xf32>
    %27 = arith.addf %24, %26 : vector<16x1xf32>
    %c0_15 = arith.constant 0 : index
    %c0_16 = arith.constant 0 : index
    %28 = vector.load %arg9[%c0_15, %c0_16] : memref<16x1xf32, #tpu.memory_space<vmem>>, vector<16x1xf32>
    tpu.vector_store %arg9[%c0_15, %c0_16], %27 {strides = array<i32>} : memref<16x1xf32, #tpu.memory_space<vmem>>, vector<16x1xf32>,
    %c0_17 = arith.constant 0 : index
    %c0_18 = arith.constant 0 : index
    %29 = vector.load %arg7[%c0_17, %c0_18] : memref<16x1xf32, #tpu.memory_space<vmem>>, vector<16x1xf32>
    tpu.vector_store %arg7[%c0_17, %c0_18], %12 {strides = array<i32>} : memref<16x1xf32, #tpu.memory_space<vmem>>, vector<16x1xf32>,
    %c0_i32_19 = arith.constant 0 : i32
    %30 = arith.cmpi eq, %arg2, %c0_i32_19 : i32
    %31 = arith.extui %30 : i1 to i32
    %c0_i32_20 = arith.constant 0 : i32
    %32 = arith.cmpi ne, %31, %c0_i32_20 : i32
    scf.if %32 {
      %c0_24 = arith.constant 0 : index
      %c0_25 = arith.constant 0 : index
      %38 = vector.load %arg7[%c0_24, %c0_25] : memref<16x1xf32, #tpu.memory_space<vmem>>, vector<16x1xf32>
      %c0_26 = arith.constant 0 : index
      %c0_27 = arith.constant 0 : index
      %39 = vector.load %arg8[%c0_26, %c0_27] : memref<16x1xf32, #tpu.memory_space<vmem>>, vector<16x1xf32>
      %40 = math.log %39 : vector<16x1xf32>
      %41 = arith.addf %38, %40 : vector<16x1xf32>
      %c0_28 = arith.constant 0 : index
      %c0_29 = arith.constant 0 : index
      %42 = vector.load %arg9[%c0_28, %c0_29] : memref<16x1xf32, #tpu.memory_space<vmem>>, vector<16x1xf32>
      %cst_30 = arith.constant 1.280000e+02 : f32
      %43 = vector.broadcast %cst_30 : f32 to vector<16x1xf32>
      %44 = arith.mulf %43, %41 : vector<16x1xf32>
      %45 = arith.subf %42, %44 : vector<16x1xf32>
      %c0_31 = arith.constant 0 : index
      %c0_32 = arith.constant 0 : index
      %46 = vector.load %arg4[%c0_31, %c0_32] : memref<16x1xf32, #tpu.memory_space<vmem>>, vector<16x1xf32>
      %47 = arith.subf %46, %41 : vector<16x1xf32>
      %cst_33 = arith.constant 7.87401571E-4 : f32
      %48 = vector.broadcast %cst_33 : f32 to vector<16x1xf32>
      %49 = arith.mulf %48, %45 : vector<16x1xf32>
      %cst_34 = arith.constant 0.899212599 : f32
      %50 = vector.broadcast %cst_34 : f32 to vector<16x1xf32>
      %51 = arith.mulf %50, %47 : vector<16x1xf32>
      %52 = arith.addf %49, %51 : vector<16x1xf32>
      %cst_35 = arith.constant 0.000000e+00 : f32
      %53 = vector.broadcast %cst_35 : f32 to vector<16x1xf32>
      %54 = arith.subf %53, %52 : vector<16x1xf32>
      %c0_36 = arith.constant 0 : index
      %c0_37 = arith.constant 0 : index
      %55 = vector.load %arg5[%c0_36, %c0_37] : memref<16x1xi32, #tpu.memory_space<vmem>>, vector<16x1xi32>
      %c-100_i32 = arith.constant -100 : i32
      %56 = vector.broadcast %c-100_i32 : i32 to vector<16x1xi32>
      %57 = arith.cmpi ne, %55, %56 : vector<16x1xi32>
      %c0_38 = arith.constant 0 : index
      %c0_39 = arith.constant 0 : index
      %58 = vector.load %arg10[%c0_38, %c0_39] : memref<16x1xf32, #tpu.memory_space<vmem>>, vector<16x1xf32>
      %cst_40 = arith.constant 0.000000e+00 : f32
      %59 = vector.broadcast %cst_40 : f32 to vector<16x1xf32>
      %60 = arith.select %57, %54, %59 : vector<16x1xi1>, vector<16x1xf32>
      %61 = arith.addf %58, %60 : vector<16x1xf32>
      %c0_41 = arith.constant 0 : index
      %c0_42 = arith.constant 0 : index
      %62 = vector.load %arg10[%c0_41, %c0_42] : memref<16x1xf32, #tpu.memory_space<vmem>>, vector<16x1xf32>
      tpu.vector_store %arg10[%c0_41, %c0_42], %61 {strides = array<i32>} : memref<16x1xf32, #tpu.memory_space<vmem>>, vector<16x1xf32>,
    } else {
    }
    %c0_i32_21 = arith.constant 0 : i32
    %33 = arith.cmpi eq, %arg1, %c0_i32_21 : i32
    %c0_i32_22 = arith.constant 0 : i32
    %34 = arith.cmpi eq, %arg2, %c0_i32_22 : i32
    %35 = arith.andi %33, %34 : i1
    %36 = arith.extui %35 : i1 to i32
    %c0_i32_23 = arith.constant 0 : i32
    %37 = arith.cmpi ne, %36, %c0_i32_23 : i32
    scf.if %37 {
      %c0_24 = arith.constant 0 : index
      %c0_25 = arith.constant 0 : index
      %38 = vector.load %arg10[%c0_24, %c0_25] : memref<16x1xf32, #tpu.memory_space<vmem>>, vector<16x1xf32>
      %39 = vector.shape_cast %38 : vector<16x1xf32> to vector<1x16x1xf32>
      %cst_26 = arith.constant dense<0.000000e+00> : vector<1xf32>
      %40 = vector.multi_reduction <add>, %39, %cst_26 [1, 2] : vector<1x16x1xf32> to vector<1xf32>
      %41 = vector.shape_cast %40 : vector<1xf32> to vector<1x1x1xf32>
      %42 = vector.extract %41[0, 0, 0] : f32 from vector<1x1x1xf32>
      %43 = tpu.iota {dimensions = array<i32: 0>} : vector<8x128xi32>
      %44 = tpu.iota {dimensions = array<i32: 1>} : vector<8x128xi32>
      %c0_i32_27 = arith.constant 0 : i32
      %45 = vector.broadcast %c0_i32_27 : i32 to vector<8x128xi32>
      %46 = arith.cmpi eq, %43, %45 : vector<8x128xi32>
      %c0_i32_28 = arith.constant 0 : i32
      %47 = vector.broadcast %c0_i32_28 : i32 to vector<8x128xi32>
      %48 = arith.cmpi eq, %44, %47 : vector<8x128xi32>
      %49 = arith.andi %46, %48 : vector<8x128xi1>
      %cst_29 = arith.constant 0.000000e+00 : f32
      %50 = vector.broadcast %42 : f32 to vector<8x128xf32>
      %51 = vector.broadcast %cst_29 : f32 to vector<8x128xf32>
      %52 = arith.select %49, %50, %51 : vector<8x128xi1>, vector<8x128xf32>
      %c0_30 = arith.constant 0 : index
      %c0_31 = arith.constant 0 : index
      %53 = vector.load %arg6[%c0_30, %c0_31] : memref<8x128xf32, #tpu.memory_space<vmem>>, vector<8x128xf32>
      tpu.vector_store %arg6[%c0_30, %c0_31], %52 {strides = array<i32>} : memref<8x128xf32, #tpu.memory_space<vmem>>, vector<8x128xf32>,
    } else {
    }
    return
  }
  func.func @transform_0(%arg0: i32, %arg1: i32, %arg2: i32) -> (i32, i32) {
    %c1_i32 = arith.constant 1 : i32
    %0 = arith.muli %arg0, %c1_i32 : i32
    %1 = arith.addi %0, %arg1 : i32
    %c0_i32 = arith.constant 0 : i32
    %2 = arith.minsi %1, %c0_i32 : i32
    %c0_i32_0 = arith.constant 0 : i32
    return %2, %arg2 : i32, i32
  }
  func.func @transform_1(%arg0: i32, %arg1: i32, %arg2: i32) -> (i32, i32) {
    %c1_i32 = arith.constant 1 : i32
    %0 = arith.muli %arg0, %c1_i32 : i32
    %1 = arith.addi %0, %arg1 : i32
    %c0_i32 = arith.constant 0 : i32
    %c0_i32_0 = arith.constant 0 : i32
    return %1, %c0_i32 : i32, i32
  }
  func.func @transform_2(%arg0: i32, %arg1: i32, %arg2: i32) -> (i32, i32) {
    %c1_i32 = arith.constant 1 : i32
    %0 = arith.muli %arg0, %c1_i32 : i32
    %1 = arith.addi %0, %arg1 : i32
    %c0_i32 = arith.constant 0 : i32
    %c0_i32_0 = arith.constant 0 : i32
    return %1, %c0_i32 : i32, i32
  }
  func.func @transform_3(%arg0: i32, %arg1: i32, %arg2: i32) -> (i32, i32) {
    %c0_i32 = arith.constant 0 : i32
    %c0_i32_0 = arith.constant 0 : i32
    return %arg0, %c0_i32 : i32, i32
  }
}

</mosaic_0001>

<llo_original>
// kernel: tpu_custom_call.1
$region0: #{tpu_custom_call.1}
  #allocation0 [shape = 'u32[]', space=smem, size = 0x4, offset = 0x4, fixed_abs, tag = 'smem constant byte address 0x4 - core index']
  #allocation1 [shape = 'u32[144,128]{1,0:T(1,128)}', space=vmem, size = 0x12000, scoped, tag = 'internal scratch']
  #allocation2 [shape = 'f32[16,1]{1,0:T(8,128)}', space=vmem, size = 0x2000, scoped, tag = 'scratch operand']
  #allocation3 [shape = 'f32[16,1]{1,0:T(8,128)}', space=vmem, size = 0x2000, scoped, tag = 'scratch operand']
  #allocation4 [shape = 'f32[16,1]{1,0:T(8,128)}', space=vmem, size = 0x2000, scoped, tag = 'scratch operand']
  #allocation5 [shape = 'f32[16,1]{1,0:T(8,128)}', space=vmem, size = 0x2000, scoped, tag = 'scratch operand']
  %s0 = inlined_call_operand.vmem [shape: f32[16,128], index: 0, kind: input, shape index: {}]
  %s1 = inlined_call_operand.vmem [shape: f32[16,1], index: 1, kind: input, shape index: {}]
  %s2 = inlined_call_operand.vmem [shape: s32[16,1], index: 2, kind: input, shape index: {}]
  %s3 = inlined_call_operand.hbm [shape: f32[8,128], index: 3, kind: output, shape index: {}]
  %s4 = sld [smem:[#allocation0]]
  $region38: #{tpu_custom_call.1} parent=0
    _
  %s6 = ssub.s32 1, %s4
  %s7 = scalar_select 0, %s6, %s4
  $region1: #{tpu_custom_call.1} parent=0
    #allocation6 [shape = 'u8[4096]{0}', space=vmem, size = 0x1000, scoped, tag = 'output window, operand 0, single buffered']
    #allocation7 [shape = 's32[1]{0}', space=sflag, size = 0x4, scoped, tag = 'scoped memory for tpu_custom_call.1']
    %8 = vsyncpa [#allocation7], 0
    // Predicated region
    $region2: #{tpu_custom_call.1} parent=1 // pred_check
      _
    $region3: #{tpu_custom_call.1} parent=1 // pred_check_branch
      %10 = sbr.rel (0) target = $region5
    $region4: #{tpu_custom_call.1} parent=1 // pred_region
      %s11 = sadd.s32 0, 0
      %p12 = scmp.lt.s32.totalorder %s11, 0
      %s13 = scalar_select %p12, %s11, 0
      %s14 = smul.u32 2, %s13
      %p15 = scmp.lt.s32.totalorder %s14, 1
      %s16 = scalar_select %p15, %s14, 1
      %s17 = smul.addr %s16, 8
      %s18 = scalar_lea.vmem %s0, %s17
      %s19 = sadd.s32 0, 0
      %p20 = scmp.lt.s32.totalorder %s19, 0
      %s21 = scalar_select %p20, %s19, 0
      %s22 = smul.u32 2, %s21
    $region5: #{tpu_custom_call.1} parent=1 // pred_fallthru
      _
    // Predicated region
    $region6: #{tpu_custom_call.1} parent=1 // pred_check
      _
    $region7: #{tpu_custom_call.1} parent=1 // pred_check_branch
      %24 = sbr.rel (0) target = $region9
    $region8: #{tpu_custom_call.1} parent=1 // pred_region
      %s25 = sadd.s32 0, 0
      %s26 = smul.u32 2, %s25
      %p27 = scmp.lt.s32.totalorder %s26, 1
      %s28 = scalar_select %p27, %s26, 1
      %s29 = smul.addr %s28, 8
      %s30 = scalar_lea.vmem %s1, %s29
      %s31 = sadd.s32 0, 0
      %s32 = smul.u32 2, %s31
    $region9: #{tpu_custom_call.1} parent=1 // pred_fallthru
      _
    // Predicated region
    $region10: #{tpu_custom_call.1} parent=1 // pred_check
      _
    $region11: #{tpu_custom_call.1} parent=1 // pred_check_branch
      %34 = sbr.rel (0) target = $region13
    $region12: #{tpu_custom_call.1} parent=1 // pred_region
      %s35 = sadd.s32 0, 0
      %s36 = smul.u32 2, %s35
      %p37 = scmp.lt.s32.totalorder %s36, 1
      %s38 = scalar_select %p37, %s36, 1
      %s39 = smul.addr %s38, 8
      %s40 = scalar_lea.vmem %s2, %s39
      %s41 = sadd.s32 0, 0
      %s42 = smul.u32 2, %s41
    $region13: #{tpu_custom_call.1} parent=1 // pred_fallthru
      _
    %s43 = sadd.s32 0, 0
    %p44 = scmp.lt.s32.totalorder %s43, 0
    %s45 = scalar_select %p44, %s43, 0
    %s46 = smul.u32 2, %s45
    %p47 = scmp.lt.s32.totalorder %s46, 1
    %s48 = scalar_select %p47, %s46, 1
    %s49 = smul.addr %s48, 8
    %s50 = scalar_lea.vmem %s0, %s49
    %s51 = sadd.s32 0, 0
    %s52 = smul.u32 2, %s51
    %p53 = scmp.lt.s32.totalorder %s52, 1
    %s54 = scalar_select %p53, %s52, 1
    %s55 = smul.addr %s54, 8
    %s56 = scalar_lea.vmem %s1, %s55
    %s57 = sadd.s32 0, 0
    %s58 = smul.u32 2, %s57
    %p59 = scmp.lt.s32.totalorder %s58, 1
    %s60 = scalar_select %p59, %s58, 1
    %s61 = smul.addr %s60, 8
    %s62 = scalar_lea.vmem %s2, %s61
    %s63 = sadd.s32 0, 0
    %p64 = scmp.lt.s32.totalorder %s63, 0
    %s65 = scalar_select %p64, %s63, 0
    %s66 = smul.u32 2, %s65
    %p67 = scmp.lt.s32.totalorder %s66, 1
    %s68 = scalar_select %p67, %s66, 1
    %s69 = smul.addr %s68, 8
    %s70 = scalar_lea.vmem %s0, %s69
    %s71 = sadd.s32 0, 0
    %p72 = scmp.lt.s32.totalorder %s71, 0
    %s73 = scalar_select %p72, %s71, 0
    %s74 = smul.u32 2, %s73
    %s75 = sadd.s32 0, 0
    %s76 = smul.u32 2, %s75
    %p77 = scmp.lt.s32.totalorder %s76, 1
    %s78 = scalar_select %p77, %s76, 1
    %s79 = smul.addr %s78, 8
    %s80 = scalar_lea.vmem %s1, %s79
    %s81 = sadd.s32 0, 0
    %s82 = smul.u32 2, %s81
    %s83 = sadd.s32 0, 0
    %s84 = smul.u32 2, %s83
    %p85 = scmp.lt.s32.totalorder %s84, 1
    %s86 = scalar_select %p85, %s84, 1
    %s87 = smul.addr %s86, 8
    %s88 = scalar_lea.vmem %s2, %s87
    %s89 = sadd.s32 0, 0
    %s90 = smul.u32 2, %s89
    %p91 = scmp.eq.s32.totalorder 0, 0
    %p92 = scmp.eq.s32.totalorder 0, 0
    %p93 = pnand %p91, %p92
    %p94 = pneg %p93
    // Predicated region
    $region14: #{tpu_custom_call.1} parent=1 // pred_check
      _
    $region15: #{tpu_custom_call.1} parent=1 // pred_check_branch
      %96 = sbr.rel (%p93) target = $region17
    $region16: #{tpu_custom_call.1} parent=1 // pred_region
      %vm97 = vcmask 7168
      %98 = vst.msk [vmem:[#allocation5] sm:$0xff] %vm97, 0.0
      %99 = vst.msk [vmem:[#allocation5 + $0x8] sm:$0xff] %vm97, 0.0
    $region17: #{tpu_custom_call.1} parent=1 // pred_fallthru
      _
    // Predicated region
    $region18: #{tpu_custom_call.1} parent=1 // pred_check
      %p100 = pneg %p92
    $region19: #{tpu_custom_call.1} parent=1 // pred_check_branch
      %102 = sbr.rel (%p100) target = $region21
    $region20: #{tpu_custom_call.1} parent=1 // pred_region
      %vm103 = vcmask 7168
      %104 = vst.msk [vmem:[#allocation2] sm:$0xff] %vm103, -inf
      %105 = vst.msk [vmem:[#allocation2 + $0x8] sm:$0xff] %vm103, -inf
      %106 = vst.msk [vmem:[#allocation3] sm:$0xff] %vm103, 0.0
      %107 = vst.msk [vmem:[#allocation3 + $0x8] sm:$0xff] %vm103, 0.0
      %108 = vst.msk [vmem:[#allocation4] sm:$0xff] %vm103, 0.0
      %109 = vst.msk [vmem:[#allocation4 + $0x8] sm:$0xff] %vm103, 0.0
    $region21: #{tpu_custom_call.1} parent=1 // pred_fallthru
      _
    %v110 = vld [vmem:[%s70] sm:$0xff]
    %v111 = vld [vmem:[%s70 + $0x8] sm:$0xff]
    %v112 = vld [vmem:[#allocation2] sm:$0xff]
    %v113 = vld [vmem:[#allocation2 + $0x8] sm:$0xff]
    %114 = vmax.xlane.f32.xlu0 %v110
    %v115 = vpop.xlane.xlu0 %114
    %116 = vmax.xlane.f32.xlu0 %v111
    %v117 = vpop.xlane.xlu0 %116
    %v118 = vmax.f32 %v112, %v115
    %v119 = vmax.f32 %v113, %v117
    %v120 = vsub.f32 %v112, %v118
    %v121 = vsub.f32 %v113, %v119
    %v122 = vmul.f32 %v120, 1.442695
    %v123 = vpow.pop %v122
    %v124 = vmul.f32 %v121, 1.442695
    %v125 = vpow.pop %v124
    %v126 = vld [vmem:[#allocation3] sm:$0xff]
    %v127 = vld [vmem:[#allocation3 + $0x8] sm:$0xff]
    %v128 = vmul.f32 %v123, %v126
    %v129 = vmul.f32 %v125, %v127
    %131 = vset.pattern.permute.xlu0 0
    %132 = vperm.xlu0 %131, %v118
    %v133 = vpop.permute.xlu0 %132
    %136 = vset.pattern.permute.xlu0 0
    %137 = vperm.xlu0 %136, %v119
    %v138 = vpop.permute.xlu0 %137
    %v140 = vsub.f32 %v110, %v133
    %v141 = vsub.f32 %v111, %v138
    %v142 = vmul.f32 %v140, 1.442695
    %v143 = vpow.pop %v142
    %v144 = vmul.f32 %v141, 1.442695
    %v145 = vpow.pop %v144
    %146 = vadd.xlane.f32.xlu0 %v143
    %v147 = vpop.xlane.xlu0 %146
    %148 = vadd.xlane.f32.xlu0 %v145
    %v149 = vpop.xlane.xlu0 %148
    %v150 = vadd.f32 %v128, %v147
    %v151 = vadd.f32 %v129, %v149
    %vm152 = vcmask 7168
    %153 = vst.msk [vmem:[#allocation3] sm:$0xff] %vm152, %v150
    %154 = vst.msk [vmem:[#allocation3 + $0x8] sm:$0xff] %vm152, %v151
    %v155 = vld [vmem:[#allocation4] sm:$0xff]
    %v156 = vld [vmem:[#allocation4 + $0x8] sm:$0xff]
    %157 = vadd.xlane.f32.xlu0 %v110
    %v158 = vpop.xlane.xlu0 %157
    %159 = vadd.xlane.f32.xlu0 %v111
    %v160 = vpop.xlane.xlu0 %159
    %v161 = vadd.f32 %v155, %v158
    %v162 = vadd.f32 %v156, %v160
    %163 = vst.msk [vmem:[#allocation4] sm:$0xff] %vm152, %v161
    %164 = vst.msk [vmem:[#allocation4 + $0x8] sm:$0xff] %vm152, %v162
    %165 = vst.msk [vmem:[#allocation2] sm:$0xff] %vm152, %v118
    %166 = vst.msk [vmem:[#allocation2 + $0x8] sm:$0xff] %vm152, %v119
    // Predicated region
    $region22: #{tpu_custom_call.1} parent=1 // pred_check
      %p167 = pneg %p92
    $region23: #{tpu_custom_call.1} parent=1 // pred_check_branch
      %169 = sbr.rel (%p167) target = $region25
    $region24: #{tpu_custom_call.1} parent=1 // pred_region
      %v170 = vld [vmem:[#allocation2] sm:$0xff]
      %v171 = vld [vmem:[#allocation2 + $0x8] sm:$0xff]
      %v172 = vld [vmem:[#allocation3] sm:$0xff]
      %v173 = vld [vmem:[#allocation3 + $0x8] sm:$0xff]
      %v174 = vlog2.pop %v172
      %v175 = vmul.f32 %v174, 0.6931472
      %v176 = vlog2.pop %v173
      %v177 = vmul.f32 %v176, 0.6931472
      %v178 = vadd.f32 %v170, %v175
      %v179 = vadd.f32 %v171, %v177
      %v180 = vld [vmem:[#allocation4] sm:$0xff]
      %v181 = vld [vmem:[#allocation4 + $0x8] sm:$0xff]
      %v182 = vmul.f32 %v178, 128.0
      %v183 = vmul.f32 %v179, 128.0
      %v184 = vsub.f32 %v180, %v182
      %v185 = vsub.f32 %v181, %v183
      %v186 = vld [vmem:[%s80] sm:$0xff]
      %v187 = vld [vmem:[%s80 + $0x8] sm:$0xff]
      %v188 = vsub.f32 %v186, %v178
      %v189 = vsub.f32 %v187, %v179
      %v190 = vmul.f32 %v184, 0.0007874016
      %v191 = vmul.f32 %v185, 0.0007874016
      %v192 = vmul.f32 %v188, 0.8992126
      %v193 = vmul.f32 %v189, 0.8992126
      %v194 = vadd.f32 %v190, %v192
      %v195 = vadd.f32 %v191, %v193
      %v196 = vsub.f32 0.0, %v194
      %v197 = vsub.f32 0.0, %v195
      %v198 = vld [vmem:[%s88] sm:$0xff]
      %v199 = vld [vmem:[%s88 + $0x8] sm:$0xff]
      %vm200 = vcmp.ne.s32.totalorder %v198, 4294967196
      %vm201 = vcmp.ne.s32.totalorder %v199, 4294967196
      %v202 = vld [vmem:[#allocation5] sm:$0xff]
      %v203 = vld [vmem:[#allocation5 + $0x8] sm:$0xff]
      %v204 = vsel %vm200, %v196, 0.0
      %v205 = vsel %vm201, %v197, 0.0
      %v206 = vadd.f32 %v202, %v204
      %v207 = vadd.f32 %v203, %v205
      %208 = vst.msk [vmem:[#allocation5] sm:$0xff] %vm152, %v206
      %209 = vst.msk [vmem:[#allocation5 + $0x8] sm:$0xff] %vm152, %v207
    $region25: #{tpu_custom_call.1} parent=1 // pred_fallthru
      _
    // Predicated region
    $region26: #{tpu_custom_call.1} parent=1 // pred_check
      _
    $region27: #{tpu_custom_call.1} parent=1 // pred_check_branch
      %211 = sbr.rel (%p93) target = $region29
    $region28: #{tpu_custom_call.1} parent=1 // pred_region
      %v212 = vld [vmem:[#allocation5] sm:$0xff]
      %v213 = vld [vmem:[#allocation5 + $0x8] sm:$0xff]
      %v214 = vsel %vm152, %v212, 0.0
      %v215 = vsel %vm152, %v213, 0.0
      %v216 = vadd.f32 %v214, %v215
      %217 = vadd.xlane.f32.xlu0 %v216
      %v218 = vpop.xlane.xlu0 %217
      %v219 = vrot.slane %v218, 4
      %v220 = vadd.f32 %v218, %v219
      %v221 = vrot.slane %v220, 2
      %v222 = vadd.f32 %v220, %v221
      %v223 = vrot.slane %v222, 1
      %v224 = vadd.f32 %v222, %v223
      %s225 = vtos %v224
      %v226 = vlaneseq
      %v227 = vshrl.u32 %v226, 7
      %v228 = vlaneseq
      %v229 = vand.u32 %v228, 127
      %vm230 = vcmp.eq.s32.totalorder %v227, 0
      %vm231 = vcmp.eq.s32.totalorder %v229, 0
      %vm232 = vmand %vm230, %vm231
      %v233 = vstv %s225
      %v234 = vsel %vm232, %v233, 0.0
      %235 = vst [vmem:[#allocation6] sm:$0xff] %v234
    $region29: #{tpu_custom_call.1} parent=1 // pred_fallthru
      _
    // Predicated region
    $region30: #{tpu_custom_call.1} parent=1 // pred_check
      _
    $region31: #{tpu_custom_call.1} parent=1 // pred_check_branch
      %237 = sbr.rel (0) target = $region33
    $region32: #{tpu_custom_call.1} parent=1 // pred_region
      %s239 = ssub.s32 128, 128
      %240 = vsyncadd [#allocation7], %s239
      %s242 = sshll.u32 [#allocation6], 4
      %s243 = int_to_ptr.vmem [resolvable:$true] %s242
      %245 = dma.vmem_to_hbm [thread:$0]  %s243, 128, %s3, [#allocation7]
    $region33: #{tpu_custom_call.1} parent=1 // pred_fallthru
      _
    // Predicated region
    $region34: #{tpu_custom_call.1} parent=1 // pred_check
      _
    $region35: #{tpu_custom_call.1} parent=1 // pred_check_branch
      %247 = sbr.rel (0) target = $region37
    $region36: #{tpu_custom_call.1} parent=1 // pred_region
      %248 = dma.done [#allocation7], 128
    $region37: #{tpu_custom_call.1} parent=1 // pred_fallthru
      _
    %249 = vsyncpa [#allocation7], 1

</llo_original>
